<compile_context>
chip_gen: v6e
topology: v6e:2x2x1
jax: 0.10.0
libtpu: 0.0.40
codegen_flags: <defaults>
</compile_context>

<pallas_src>
import functools

import jax
import jax.numpy as jnp
from jax.experimental import pallas as pl
from jax.experimental.pallas import tpu as pltpu


def global_cnn_kernel(x_ref, pos_ref, wct_ref, bc_ref, pool_ref, wft_ref, bf_ref,
                      out_ref, xpad_ref, patch_ref, *,
                      height, width, kh_size, kw_size, pad_lanes):
    # x_ref    : (Cin, R)            flat activation block (R = Bblk*H*W in lanes), bf16
    # pos_ref  : (2, R)              hoisted (h, w) lane coordinates, int32
    # wct_ref  : (F, KH*KW*Cin)      conv weight, cols ordered (kh, kw, cin), bf16
    # bc_ref   : (F, 1)              conv bias, f32
    # pool_ref : (R, Bblk)           block-diagonal 1/(H*W) mean-pool operand, bf16
    # wft_ref  : (C, F)              fc weight (PyTorch Linear layout), bf16
    # bf_ref   : (C, 1)              fc bias, f32
    # out_ref  : (C, Bblk)           logits tile (wrapper transposes to (Bblk, C))
    # xpad_ref : (Cin, PAD+R+PAD)    lane-padded flat activation, f32 scratch
    # patch_ref: (KH*KW*Cin, R)      im2col patches, f32 scratch
    Cin, R = x_ref.shape
    H, W = height, width
    KH, KW = kh_size, kw_size
    PAD = pad_lanes

    # Stage the flat activation (bf16 in HBM) into a lane-padded f32 VMEM buffer.
    # Only the two PAD-wide halos are zeroed; out-of-range taps are also masked below.
    xpad_ref[:, :PAD] = jnp.zeros((Cin, PAD), jnp.float32)
    xpad_ref[:, PAD + R:] = jnp.zeros((Cin, PAD), jnp.float32)
    xpad_ref[:, PAD:PAD + R] = x_ref[...].astype(jnp.float32)

    # Per-lane (h, w) coordinates (hoisted constants from the wrapper).
    h_pos = pos_ref[0:1, :]                                   # (1, R) int32
    w_pos = pos_ref[1:2, :]                                   # (1, R) int32

    # im2col: KH*KW shifted + boundary-masked copies assembled in VMEM.
    for kh in range(KH):
        for kw in range(KW):
            dh = kh - (KH - 1) // 2
            dw = kw - (KW - 1) // 2
            shift = dh * W + dw
            row = xpad_ref[:, PAD + shift:PAD + shift + R]    # (Cin, R) static lane shift
            if dh == 0 and dw == 0:
                masked = row
            else:
                valid = ((h_pos + dh >= 0) & (h_pos + dh < H) &
                         (w_pos + dw >= 0) & (w_pos + dw < W))
                masked = jnp.where(valid, row, 0.0)
            tap = kh * KW + kw
            patch_ref[tap * Cin:(tap + 1) * Cin, :] = masked

    # Conv = ONE MXU matmul (K = KH*KW*Cin, N = R lane-dense); bf16 operands, f32 acc.
    conv_t = jnp.dot(wct_ref[...], patch_ref[...].astype(jnp.bfloat16),
                     preferred_element_type=jnp.float32)      # (F, R)
    conv_t = jnp.maximum(conv_t + bc_ref[...], 0.0)           # bias + ReLU (f32, VPU)

    # Global average pool = matmul against the constant block-diagonal 1/(H*W) operand.
    pooled = jnp.dot(conv_t.astype(jnp.bfloat16), pool_ref[...],
                     preferred_element_type=jnp.float32)      # (F, Bblk)

    # FC head in the flipped orientation; one (C, Bblk) store per grid step.
    out_ref[...] = (jnp.dot(wft_ref[...], pooled.astype(jnp.bfloat16),
                            preferred_element_type=jnp.float32)
                    + bf_ref[...])                            # (C, Bblk)


def global_cnn_forward(x_nchw, wc, bc, wf, bf, *, max_block_b=64):
    """x_nchw: (B, Cin, H, W) f32.  wc: (F, Cin, KH, KW).  wf: (C, F).  Returns (B, C)."""
    B, Cin, H, W = x_nchw.shape
    F, _, KH, KW = wc.shape
    C = wf.shape[0]
    hw = H * W
    K = KH * KW * Cin

    # Batch blocking: multi-block tiling only when the lane dims stay 128-aligned and B
    # divides evenly; otherwise the whole batch runs in one grid step (no padded garbage
    # rows to discard).  On v7x pick max_block_b so nb >= 2 and both TensorCores get work.
    Bblk = min(B, max_block_b)
    if B % Bblk != 0 or (B // Bblk > 1 and ((Bblk * hw) % 128 != 0 or Bblk % 128 != 0)):
        Bblk = B
    nb = B // Bblk
    R = Bblk * hw

    # Lane-tile-aligned halo, >= the largest tap shift.
    max_shift = ((KH - 1) // 2) * W + (KW - 1) // 2
    PAD = ((max_shift + 127) // 128 + 1) * 128 - 128 if max_shift % 128 == 0 else \
        ((max_shift + 127) // 128) * 128
    PAD = max(PAD, 128)

    # Activation: NCHW -> (Cin, B*H*W), flat (b, h, w) index in the lane dim.
    # Metadata-only for Cin == 1 (the module default); bf16 halves HBM->VMEM bytes.
    x_flat = jnp.transpose(x_nchw, (1, 0, 2, 3)).reshape(Cin, B * hw).astype(jnp.bfloat16)

    # Hoisted constants: per-lane (h, w) coordinates for the tap boundary masks.
    r_idx = jnp.arange(R, dtype=jnp.int32)
    pos = jnp.stack([(r_idx // W) % H, r_idx % W], axis=0)             # (2, R) int32

    # Conv weight -> (F, KH*KW*Cin), columns ordered (kh, kw, cin) to match patch rows.
    wct = jnp.transpose(wc, (0, 2, 3, 1)).reshape(F, K).astype(jnp.bfloat16)
    bc2 = bc.reshape(F, 1).astype(jnp.float32)
    wft = wf.astype(jnp.bfloat16)                                      # (C, F)
    bf2 = bf.reshape(C, 1).astype(jnp.float32)

    # Constant block-diagonal mean-pool operand (1/(H*W) folded in; exact in bf16 for
    # power-of-two H*W).  O(Bblk^2*hw) bytes -> keep Bblk modest; use an in-kernel
    # segment reduce instead before scaling Bblk toward v7x's 64 MiB VMEM.
    pool = (r_idx[:, None] // hw == jnp.arange(Bblk, dtype=jnp.int32)[None, :])
    pool = (pool.astype(jnp.float32) / hw).astype(jnp.bfloat16)        # (R, Bblk)

    kernel = functools.partial(global_cnn_kernel, height=H, width=W,
                               kh_size=KH, kw_size=KW, pad_lanes=PAD)

    out_cb = pl.pallas_call(
        kernel,
        out_shape=jax.ShapeDtypeStruct((C, B), jnp.float32),
        grid_spec=pltpu.PrefetchScalarGridSpec(
            num_scalar_prefetch=0,
            grid=(nb,),
            in_specs=[
                pl.BlockSpec((Cin, R), lambda i: (0, i)),      # activation block
                pl.BlockSpec((2, R), lambda i: (0, 0)),        # (h, w) coords (constant)
                pl.BlockSpec((F, K), lambda i: (0, 0)),        # conv weight (constant)
                pl.BlockSpec((F, 1), lambda i: (0, 0)),        # conv bias (constant)
                pl.BlockSpec((R, Bblk), lambda i: (0, 0)),     # pool operand (constant)
                pl.BlockSpec((C, F), lambda i: (0, 0)),        # fc weight (constant)
                pl.BlockSpec((C, 1), lambda i: (0, 0)),        # fc bias (constant)
            ],
            out_specs=pl.BlockSpec((C, Bblk), lambda i: (0, i)),
            scratch_shapes=[
                pltpu.VMEM((Cin, PAD + R + PAD), jnp.float32),  # lane-padded activation
                pltpu.VMEM((K, R), jnp.float32),                # im2col patches
            ],
        ),
        # Parallel batch-block axis: with nb >= 2, v7x shards blocks across its 2 TCs.
        compiler_params=pltpu.CompilerParams(dimension_semantics=("parallel",)),
    )(x_flat, pos, wct, bc2, pool, wft, bf2)

    return out_cb.T            # (B, C); tiny (C, B) transpose stays in the XLA wrapper


def reference_forward(x_nchw, wc, bc, wf, bf):
    """Pure-JAX reference matching the PyTorch module semantics (f32 throughout)."""
    conv = jax.lax.conv_general_dilated(
        x_nchw, wc, window_strides=(1, 1), padding="SAME",
        dimension_numbers=("NCHW", "OIHW", "NCHW"))
    conv = jnp.maximum(conv + bc.reshape(1, -1, 1, 1), 0.0)
    pooled = jnp.mean(conv, axis=(2, 3))                      # AdaptiveAvgPool2d(1)
    return pooled @ wf.T + bf.reshape(1, -1)                  # nn.Linear(F, C)


if __name__ == "__main__":
    # Module defaults: in_channels=1, num_filters=8, num_classes=10.
    B, Cin, H, W = 2, 1, 16, 16
    F, C = 8, 10

    key = jax.random.PRNGKey(0)
    kx, kwc, kbc, kwf, kbf = jax.random.split(key, 5)
    x = jax.random.normal(kx, (B, Cin, H, W), dtype=jnp.float32)
    wc = 0.1 * jax.random.normal(kwc, (F, Cin, 3, 3), dtype=jnp.float32)   # Conv2d weight
    bc = 0.1 * jax.random.normal(kbc, (F,), dtype=jnp.float32)
    wf = 0.1 * jax.random.normal(kwf, (C, F), dtype=jnp.float32)           # Linear weight
    bf = 0.1 * jax.random.normal(kbf, (C,), dtype=jnp.float32)

    out = jax.block_until_ready(global_cnn_forward(x, wc, bc, wf, bf))
    ref = jax.block_until_ready(reference_forward(x, wc, bc, wf, bf))

    assert out.shape == (B, C), out.shape
    # bf16 MXU operands with f32 accumulation -> tolerance sized for bf16 rounding.
    assert jnp.allclose(out, ref, rtol=2e-2, atol=2e-2), (out, ref)
    print("KERNEL_OK")
</pallas_src>

<mosaic_0001>
module attributes {stable_mosaic.version = 11 : i64} {
  func.func @global_cnn_kernel(%arg0: i32, %arg1: memref<1x512xbf16, #tpu.memory_space<vmem>>, %arg2: memref<2x512xi32, #tpu.memory_space<vmem>>, %arg3: memref<8x9xbf16, #tpu.memory_space<vmem>>, %arg4: memref<8x1xf32, #tpu.memory_space<vmem>>, %arg5: memref<512x2xbf16, #tpu.memory_space<vmem>>, %arg6: memref<10x8xbf16, #tpu.memory_space<vmem>>, %arg7: memref<10x1xf32, #tpu.memory_space<vmem>>, %arg8: memref<10x2xf32, #tpu.memory_space<vmem>>, %arg9: memref<1x768xf32, #tpu.memory_space<vmem>>, %arg10: memref<9x512xf32, #tpu.memory_space<vmem>>) attributes {dimension_semantics = [#tpu.dimension_semantics<parallel>], iteration_bounds = array<i64: 1>, scalar_prefetch = 0 : i64, scratch_operands = 2 : i64, tpu.core_type = #tpu.core_type<tc>, window_params = [{transform_indices = @transform_0, window_bounds = array<i64: 1, 512>}, {pipeline_mode = #tpu.pipeline_mode<synchronous>, transform_indices = @transform_1, window_bounds = array<i64: 2, 512>}, {pipeline_mode = #tpu.pipeline_mode<synchronous>, transform_indices = @transform_2, window_bounds = array<i64: 8, 9>}, {pipeline_mode = #tpu.pipeline_mode<synchronous>, transform_indices = @transform_3, window_bounds = array<i64: 8, 1>}, {pipeline_mode = #tpu.pipeline_mode<synchronous>, transform_indices = @transform_4, window_bounds = array<i64: 512, 2>}, {pipeline_mode = #tpu.pipeline_mode<synchronous>, transform_indices = @transform_5, window_bounds = array<i64: 10, 8>}, {pipeline_mode = #tpu.pipeline_mode<synchronous>, transform_indices = @transform_6, window_bounds = array<i64: 10, 1>}, {transform_indices = @transform_7, window_bounds = array<i64: 10, 2>}]} {
    %cst = arith.constant 0.000000e+00 : f32
    %0 = vector.broadcast %cst : f32 to vector<1x128xf32>
    %c0 = arith.constant 0 : index
    %c0_0 = arith.constant 0 : index
    %1 = vector.load %arg9[%c0, %c0_0] : memref<1x768xf32, #tpu.memory_space<vmem>>, vector<1x128xf32>
    tpu.vector_store %arg9[%c0, %c0_0], %0 {strides = array<i32>} : memref<1x768xf32, #tpu.memory_space<vmem>>, vector<1x128xf32>,
    %cst_1 = arith.constant 0.000000e+00 : f32
    %2 = vector.broadcast %cst_1 : f32 to vector<1x128xf32>
    %c0_2 = arith.constant 0 : index
    %c640 = arith.constant 640 : index
    %3 = vector.load %arg9[%c0_2, %c640] : memref<1x768xf32, #tpu.memory_space<vmem>>, vector<1x128xf32>
    tpu.vector_store %arg9[%c0_2, %c640], %2 {strides = array<i32>} : memref<1x768xf32, #tpu.memory_space<vmem>>, vector<1x128xf32>,
    %c0_3 = arith.constant 0 : index
    %c0_4 = arith.constant 0 : index
    %4 = vector.load %arg1[%c0_3, %c0_4] : memref<1x512xbf16, #tpu.memory_space<vmem>>, vector<1x512xbf16>
    %5 = arith.extf %4 : vector<1x512xbf16> to vector<1x512xf32>
    %c0_5 = arith.constant 0 : index
    %c128 = arith.constant 128 : index
    %6 = vector.load %arg9[%c0_5, %c128] : memref<1x768xf32, #tpu.memory_space<vmem>>, vector<1x512xf32>
    tpu.vector_store %arg9[%c0_5, %c128], %5 {strides = array<i32>} : memref<1x768xf32, #tpu.memory_space<vmem>>, vector<1x512xf32>,
    %c0_6 = arith.constant 0 : index
    %c0_7 = arith.constant 0 : index
    %7 = vector.load %arg2[%c0_6, %c0_7] : memref<2x512xi32, #tpu.memory_space<vmem>>, vector<1x512xi32>
    %c1 = arith.constant 1 : index
    %c0_8 = arith.constant 0 : index
    %8 = vector.load %arg2[%c1, %c0_8] : memref<2x512xi32, #tpu.memory_space<vmem>>, vector<1x512xi32>
    %c0_9 = arith.constant 0 : index
    %c111 = arith.constant 111 : index
    %9 = vector.load %arg9[%c0_9, %c111] : memref<1x768xf32, #tpu.memory_space<vmem>>, vector<1x512xf32>
    %c-1_i32 = arith.constant -1 : i32
    %10 = vector.broadcast %c-1_i32 : i32 to vector<1x512xi32>
    %11 = arith.addi %7, %10 : vector<1x512xi32>
    %c0_i32 = arith.constant 0 : i32
    %12 = vector.broadcast %c0_i32 : i32 to vector<1x512xi32>
    %13 = arith.cmpi sge, %11, %12 : vector<1x512xi32>
    %c-1_i32_10 = arith.constant -1 : i32
    %14 = vector.broadcast %c-1_i32_10 : i32 to vector<1x512xi32>
    %15 = arith.addi %7, %14 : vector<1x512xi32>
    %c16_i32 = arith.constant 16 : i32
    %16 = vector.broadcast %c16_i32 : i32 to vector<1x512xi32>
    %17 = arith.cmpi slt, %15, %16 : vector<1x512xi32>
    %18 = arith.andi %13, %17 : vector<1x512xi1>
    %c-1_i32_11 = arith.constant -1 : i32
    %19 = vector.broadcast %c-1_i32_11 : i32 to vector<1x512xi32>
    %20 = arith.addi %8, %19 : vector<1x512xi32>
    %c0_i32_12 = arith.constant 0 : i32
    %21 = vector.broadcast %c0_i32_12 : i32 to vector<1x512xi32>
    %22 = arith.cmpi sge, %20, %21 : vector<1x512xi32>
    %23 = arith.andi %18, %22 : vector<1x512xi1>
    %c-1_i32_13 = arith.constant -1 : i32
    %24 = vector.broadcast %c-1_i32_13 : i32 to vector<1x512xi32>
    %25 = arith.addi %8, %24 : vector<1x512xi32>
    %c16_i32_14 = arith.constant 16 : i32
    %26 = vector.broadcast %c16_i32_14 : i32 to vector<1x512xi32>
    %27 = arith.cmpi slt, %25, %26 : vector<1x512xi32>
    %28 = arith.andi %23, %27 : vector<1x512xi1>
    %cst_15 = arith.constant 0.000000e+00 : f32
    %29 = vector.broadcast %cst_15 : f32 to vector<1x512xf32>
    %30 = arith.select %28, %9, %29 : vector<1x512xi1>, vector<1x512xf32>
    %c0_16 = arith.constant 0 : index
    %c0_17 = arith.constant 0 : index
    %31 = vector.load %arg10[%c0_16, %c0_17] : memref<9x512xf32, #tpu.memory_space<vmem>>, vector<1x512xf32>
    tpu.vector_store %arg10[%c0_16, %c0_17], %30 {strides = array<i32>} : memref<9x512xf32, #tpu.memory_space<vmem>>, vector<1x512xf32>,
    %c0_18 = arith.constant 0 : index
    %c112 = arith.constant 112 : index
    %32 = vector.load %arg9[%c0_18, %c112] : memref<1x768xf32, #tpu.memory_space<vmem>>, vector<1x512xf32>
    %c-1_i32_19 = arith.constant -1 : i32
    %33 = vector.broadcast %c-1_i32_19 : i32 to vector<1x512xi32>
    %34 = arith.addi %7, %33 : vector<1x512xi32>
    %c0_i32_20 = arith.constant 0 : i32
    %35 = vector.broadcast %c0_i32_20 : i32 to vector<1x512xi32>
    %36 = arith.cmpi sge, %34, %35 : vector<1x512xi32>
    %c-1_i32_21 = arith.constant -1 : i32
    %37 = vector.broadcast %c-1_i32_21 : i32 to vector<1x512xi32>
    %38 = arith.addi %7, %37 : vector<1x512xi32>
    %c16_i32_22 = arith.constant 16 : i32
    %39 = vector.broadcast %c16_i32_22 : i32 to vector<1x512xi32>
    %40 = arith.cmpi slt, %38, %39 : vector<1x512xi32>
    %41 = arith.andi %36, %40 : vector<1x512xi1>
    %c0_i32_23 = arith.constant 0 : i32
    %42 = vector.broadcast %c0_i32_23 : i32 to vector<1x512xi32>
    %43 = arith.addi %8, %42 : vector<1x512xi32>
    %c0_i32_24 = arith.constant 0 : i32
    %44 = vector.broadcast %c0_i32_24 : i32 to vector<1x512xi32>
    %45 = arith.cmpi sge, %43, %44 : vector<1x512xi32>
    %46 = arith.andi %41, %45 : vector<1x512xi1>
    %c0_i32_25 = arith.constant 0 : i32
    %47 = vector.broadcast %c0_i32_25 : i32 to vector<1x512xi32>
    %48 = arith.addi %8, %47 : vector<1x512xi32>
    %c16_i32_26 = arith.constant 16 : i32
    %49 = vector.broadcast %c16_i32_26 : i32 to vector<1x512xi32>
    %50 = arith.cmpi slt, %48, %49 : vector<1x512xi32>
    %51 = arith.andi %46, %50 : vector<1x512xi1>
    %cst_27 = arith.constant 0.000000e+00 : f32
    %52 = vector.broadcast %cst_27 : f32 to vector<1x512xf32>
    %53 = arith.select %51, %32, %52 : vector<1x512xi1>, vector<1x512xf32>
    %c1_28 = arith.constant 1 : index
    %c0_29 = arith.constant 0 : index
    %54 = vector.load %arg10[%c1_28, %c0_29] : memref<9x512xf32, #tpu.memory_space<vmem>>, vector<1x512xf32>
    tpu.vector_store %arg10[%c1_28, %c0_29], %53 {strides = array<i32>} : memref<9x512xf32, #tpu.memory_space<vmem>>, vector<1x512xf32>,
    %c0_30 = arith.constant 0 : index
    %c113 = arith.constant 113 : index
    %55 = vector.load %arg9[%c0_30, %c113] : memref<1x768xf32, #tpu.memory_space<vmem>>, vector<1x512xf32>
    %c-1_i32_31 = arith.constant -1 : i32
    %56 = vector.broadcast %c-1_i32_31 : i32 to vector<1x512xi32>
    %57 = arith.addi %7, %56 : vector<1x512xi32>
    %c0_i32_32 = arith.constant 0 : i32
    %58 = vector.broadcast %c0_i32_32 : i32 to vector<1x512xi32>
    %59 = arith.cmpi sge, %57, %58 : vector<1x512xi32>
    %c-1_i32_33 = arith.constant -1 : i32
    %60 = vector.broadcast %c-1_i32_33 : i32 to vector<1x512xi32>
    %61 = arith.addi %7, %60 : vector<1x512xi32>
    %c16_i32_34 = arith.constant 16 : i32
    %62 = vector.broadcast %c16_i32_34 : i32 to vector<1x512xi32>
    %63 = arith.cmpi slt, %61, %62 : vector<1x512xi32>
    %64 = arith.andi %59, %63 : vector<1x512xi1>
    %c1_i32 = arith.constant 1 : i32
    %65 = vector.broadcast %c1_i32 : i32 to vector<1x512xi32>
    %66 = arith.addi %8, %65 : vector<1x512xi32>
    %c0_i32_35 = arith.constant 0 : i32
    %67 = vector.broadcast %c0_i32_35 : i32 to vector<1x512xi32>
    %68 = arith.cmpi sge, %66, %67 : vector<1x512xi32>
    %69 = arith.andi %64, %68 : vector<1x512xi1>
    %c1_i32_36 = arith.constant 1 : i32
    %70 = vector.broadcast %c1_i32_36 : i32 to vector<1x512xi32>
    %71 = arith.addi %8, %70 : vector<1x512xi32>
    %c16_i32_37 = arith.constant 16 : i32
    %72 = vector.broadcast %c16_i32_37 : i32 to vector<1x512xi32>
    %73 = arith.cmpi slt, %71, %72 : vector<1x512xi32>
    %74 = arith.andi %69, %73 : vector<1x512xi1>
    %cst_38 = arith.constant 0.000000e+00 : f32
    %75 = vector.broadcast %cst_38 : f32 to vector<1x512xf32>
    %76 = arith.select %74, %55, %75 : vector<1x512xi1>, vector<1x512xf32>
    %c2 = arith.constant 2 : index
    %c0_39 = arith.constant 0 : index
    %77 = vector.load %arg10[%c2, %c0_39] : memref<9x512xf32, #tpu.memory_space<vmem>>, vector<1x512xf32>
    tpu.vector_store %arg10[%c2, %c0_39], %76 {strides = array<i32>} : memref<9x512xf32, #tpu.memory_space<vmem>>, vector<1x512xf32>,
    %c0_40 = arith.constant 0 : index
    %c127 = arith.constant 127 : index
    %78 = vector.load %arg9[%c0_40, %c127] : memref<1x768xf32, #tpu.memory_space<vmem>>, vector<1x512xf32>
    %c0_i32_41 = arith.constant 0 : i32
    %79 = vector.broadcast %c0_i32_41 : i32 to vector<1x512xi32>
    %80 = arith.addi %7, %79 : vector<1x512xi32>
    %c0_i32_42 = arith.constant 0 : i32
    %81 = vector.broadcast %c0_i32_42 : i32 to vector<1x512xi32>
    %82 = arith.cmpi sge, %80, %81 : vector<1x512xi32>
    %c0_i32_43 = arith.constant 0 : i32
    %83 = vector.broadcast %c0_i32_43 : i32 to vector<1x512xi32>
    %84 = arith.addi %7, %83 : vector<1x512xi32>
    %c16_i32_44 = arith.constant 16 : i32
    %85 = vector.broadcast %c16_i32_44 : i32 to vector<1x512xi32>
    %86 = arith.cmpi slt, %84, %85 : vector<1x512xi32>
    %87 = arith.andi %82, %86 : vector<1x512xi1>
    %c-1_i32_45 = arith.constant -1 : i32
    %88 = vector.broadcast %c-1_i32_45 : i32 to vector<1x512xi32>
    %89 = arith.addi %8, %88 : vector<1x512xi32>
    %c0_i32_46 = arith.constant 0 : i32
    %90 = vector.broadcast %c0_i32_46 : i32 to vector<1x512xi32>
    %91 = arith.cmpi sge, %89, %90 : vector<1x512xi32>
    %92 = arith.andi %87, %91 : vector<1x512xi1>
    %c-1_i32_47 = arith.constant -1 : i32
    %93 = vector.broadcast %c-1_i32_47 : i32 to vector<1x512xi32>
    %94 = arith.addi %8, %93 : vector<1x512xi32>
    %c16_i32_48 = arith.constant 16 : i32
    %95 = vector.broadcast %c16_i32_48 : i32 to vector<1x512xi32>
    %96 = arith.cmpi slt, %94, %95 : vector<1x512xi32>
    %97 = arith.andi %92, %96 : vector<1x512xi1>
    %cst_49 = arith.constant 0.000000e+00 : f32
    %98 = vector.broadcast %cst_49 : f32 to vector<1x512xf32>
    %99 = arith.select %97, %78, %98 : vector<1x512xi1>, vector<1x512xf32>
    %c3 = arith.constant 3 : index
    %c0_50 = arith.constant 0 : index
    %100 = vector.load %arg10[%c3, %c0_50] : memref<9x512xf32, #tpu.memory_space<vmem>>, vector<1x512xf32>
    tpu.vector_store %arg10[%c3, %c0_50], %99 {strides = array<i32>} : memref<9x512xf32, #tpu.memory_space<vmem>>, vector<1x512xf32>,
    %c0_51 = arith.constant 0 : index
    %c128_52 = arith.constant 128 : index
    %101 = vector.load %arg9[%c0_51, %c128_52] : memref<1x768xf32, #tpu.memory_space<vmem>>, vector<1x512xf32>
    %c4 = arith.constant 4 : index
    %c0_53 = arith.constant 0 : index
    %102 = vector.load %arg10[%c4, %c0_53] : memref<9x512xf32, #tpu.memory_space<vmem>>, vector<1x512xf32>
    tpu.vector_store %arg10[%c4, %c0_53], %101 {strides = array<i32>} : memref<9x512xf32, #tpu.memory_space<vmem>>, vector<1x512xf32>,
    %c0_54 = arith.constant 0 : index
    %c129 = arith.constant 129 : index
    %103 = vector.load %arg9[%c0_54, %c129] : memref<1x768xf32, #tpu.memory_space<vmem>>, vector<1x512xf32>
    %c0_i32_55 = arith.constant 0 : i32
    %104 = vector.broadcast %c0_i32_55 : i32 to vector<1x512xi32>
    %105 = arith.addi %7, %104 : vector<1x512xi32>
    %c0_i32_56 = arith.constant 0 : i32
    %106 = vector.broadcast %c0_i32_56 : i32 to vector<1x512xi32>
    %107 = arith.cmpi sge, %105, %106 : vector<1x512xi32>
    %c0_i32_57 = arith.constant 0 : i32
    %108 = vector.broadcast %c0_i32_57 : i32 to vector<1x512xi32>
    %109 = arith.addi %7, %108 : vector<1x512xi32>
    %c16_i32_58 = arith.constant 16 : i32
    %110 = vector.broadcast %c16_i32_58 : i32 to vector<1x512xi32>
    %111 = arith.cmpi slt, %109, %110 : vector<1x512xi32>
    %112 = arith.andi %107, %111 : vector<1x512xi1>
    %c1_i32_59 = arith.constant 1 : i32
    %113 = vector.broadcast %c1_i32_59 : i32 to vector<1x512xi32>
    %114 = arith.addi %8, %113 : vector<1x512xi32>
    %c0_i32_60 = arith.constant 0 : i32
    %115 = vector.broadcast %c0_i32_60 : i32 to vector<1x512xi32>
    %116 = arith.cmpi sge, %114, %115 : vector<1x512xi32>
    %117 = arith.andi %112, %116 : vector<1x512xi1>
    %c1_i32_61 = arith.constant 1 : i32
    %118 = vector.broadcast %c1_i32_61 : i32 to vector<1x512xi32>
    %119 = arith.addi %8, %118 : vector<1x512xi32>
    %c16_i32_62 = arith.constant 16 : i32
    %120 = vector.broadcast %c16_i32_62 : i32 to vector<1x512xi32>
    %121 = arith.cmpi slt, %119, %120 : vector<1x512xi32>
    %122 = arith.andi %117, %121 : vector<1x512xi1>
    %cst_63 = arith.constant 0.000000e+00 : f32
    %123 = vector.broadcast %cst_63 : f32 to vector<1x512xf32>
    %124 = arith.select %122, %103, %123 : vector<1x512xi1>, vector<1x512xf32>
    %c5 = arith.constant 5 : index
    %c0_64 = arith.constant 0 : index
    %125 = vector.load %arg10[%c5, %c0_64] : memref<9x512xf32, #tpu.memory_space<vmem>>, vector<1x512xf32>
    tpu.vector_store %arg10[%c5, %c0_64], %124 {strides = array<i32>} : memref<9x512xf32, #tpu.memory_space<vmem>>, vector<1x512xf32>,
    %c0_65 = arith.constant 0 : index
    %c143 = arith.constant 143 : index
    %126 = vector.load %arg9[%c0_65, %c143] : memref<1x768xf32, #tpu.memory_space<vmem>>, vector<1x512xf32>
    %c1_i32_66 = arith.constant 1 : i32
    %127 = vector.broadcast %c1_i32_66 : i32 to vector<1x512xi32>
    %128 = arith.addi %7, %127 : vector<1x512xi32>
    %c0_i32_67 = arith.constant 0 : i32
    %129 = vector.broadcast %c0_i32_67 : i32 to vector<1x512xi32>
    %130 = arith.cmpi sge, %128, %129 : vector<1x512xi32>
    %c1_i32_68 = arith.constant 1 : i32
    %131 = vector.broadcast %c1_i32_68 : i32 to vector<1x512xi32>
    %132 = arith.addi %7, %131 : vector<1x512xi32>
    %c16_i32_69 = arith.constant 16 : i32
    %133 = vector.broadcast %c16_i32_69 : i32 to vector<1x512xi32>
    %134 = arith.cmpi slt, %132, %133 : vector<1x512xi32>
    %135 = arith.andi %130, %134 : vector<1x512xi1>
    %c-1_i32_70 = arith.constant -1 : i32
    %136 = vector.broadcast %c-1_i32_70 : i32 to vector<1x512xi32>
    %137 = arith.addi %8, %136 : vector<1x512xi32>
    %c0_i32_71 = arith.constant 0 : i32
    %138 = vector.broadcast %c0_i32_71 : i32 to vector<1x512xi32>
    %139 = arith.cmpi sge, %137, %138 : vector<1x512xi32>
    %140 = arith.andi %135, %139 : vector<1x512xi1>
    %c-1_i32_72 = arith.constant -1 : i32
    %141 = vector.broadcast %c-1_i32_72 : i32 to vector<1x512xi32>
    %142 = arith.addi %8, %141 : vector<1x512xi32>
    %c16_i32_73 = arith.constant 16 : i32
    %143 = vector.broadcast %c16_i32_73 : i32 to vector<1x512xi32>
    %144 = arith.cmpi slt, %142, %143 : vector<1x512xi32>
    %145 = arith.andi %140, %144 : vector<1x512xi1>
    %cst_74 = arith.constant 0.000000e+00 : f32
    %146 = vector.broadcast %cst_74 : f32 to vector<1x512xf32>
    %147 = arith.select %145, %126, %146 : vector<1x512xi1>, vector<1x512xf32>
    %c6 = arith.constant 6 : index
    %c0_75 = arith.constant 0 : index
    %148 = vector.load %arg10[%c6, %c0_75] : memref<9x512xf32, #tpu.memory_space<vmem>>, vector<1x512xf32>
    tpu.vector_store %arg10[%c6, %c0_75], %147 {strides = array<i32>} : memref<9x512xf32, #tpu.memory_space<vmem>>, vector<1x512xf32>,
    %c0_76 = arith.constant 0 : index
    %c144 = arith.constant 144 : index
    %149 = vector.load %arg9[%c0_76, %c144] : memref<1x768xf32, #tpu.memory_space<vmem>>, vector<1x512xf32>
    %c1_i32_77 = arith.constant 1 : i32
    %150 = vector.broadcast %c1_i32_77 : i32 to vector<1x512xi32>
    %151 = arith.addi %7, %150 : vector<1x512xi32>
    %c0_i32_78 = arith.constant 0 : i32
    %152 = vector.broadcast %c0_i32_78 : i32 to vector<1x512xi32>
    %153 = arith.cmpi sge, %151, %152 : vector<1x512xi32>
    %c1_i32_79 = arith.constant 1 : i32
    %154 = vector.broadcast %c1_i32_79 : i32 to vector<1x512xi32>
    %155 = arith.addi %7, %154 : vector<1x512xi32>
    %c16_i32_80 = arith.constant 16 : i32
    %156 = vector.broadcast %c16_i32_80 : i32 to vector<1x512xi32>
    %157 = arith.cmpi slt, %155, %156 : vector<1x512xi32>
    %158 = arith.andi %153, %157 : vector<1x512xi1>
    %c0_i32_81 = arith.constant 0 : i32
    %159 = vector.broadcast %c0_i32_81 : i32 to vector<1x512xi32>
    %160 = arith.addi %8, %159 : vector<1x512xi32>
    %c0_i32_82 = arith.constant 0 : i32
    %161 = vector.broadcast %c0_i32_82 : i32 to vector<1x512xi32>
    %162 = arith.cmpi sge, %160, %161 : vector<1x512xi32>
    %163 = arith.andi %158, %162 : vector<1x512xi1>
    %c0_i32_83 = arith.constant 0 : i32
    %164 = vector.broadcast %c0_i32_83 : i32 to vector<1x512xi32>
    %165 = arith.addi %8, %164 : vector<1x512xi32>
    %c16_i32_84 = arith.constant 16 : i32
    %166 = vector.broadcast %c16_i32_84 : i32 to vector<1x512xi32>
    %167 = arith.cmpi slt, %165, %166 : vector<1x512xi32>
    %168 = arith.andi %163, %167 : vector<1x512xi1>
    %cst_85 = arith.constant 0.000000e+00 : f32
    %169 = vector.broadcast %cst_85 : f32 to vector<1x512xf32>
    %170 = arith.select %168, %149, %169 : vector<1x512xi1>, vector<1x512xf32>
    %c7 = arith.constant 7 : index
    %c0_86 = arith.constant 0 : index
    %171 = vector.load %arg10[%c7, %c0_86] : memref<9x512xf32, #tpu.memory_space<vmem>>, vector<1x512xf32>
    tpu.vector_store %arg10[%c7, %c0_86], %170 {strides = array<i32>} : memref<9x512xf32, #tpu.memory_space<vmem>>, vector<1x512xf32>,
    %c0_87 = arith.constant 0 : index
    %c145 = arith.constant 145 : index
    %172 = vector.load %arg9[%c0_87, %c145] : memref<1x768xf32, #tpu.memory_space<vmem>>, vector<1x512xf32>
    %c1_i32_88 = arith.constant 1 : i32
    %173 = vector.broadcast %c1_i32_88 : i32 to vector<1x512xi32>
    %174 = arith.addi %7, %173 : vector<1x512xi32>
    %c0_i32_89 = arith.constant 0 : i32
    %175 = vector.broadcast %c0_i32_89 : i32 to vector<1x512xi32>
    %176 = arith.cmpi sge, %174, %175 : vector<1x512xi32>
    %c1_i32_90 = arith.constant 1 : i32
    %177 = vector.broadcast %c1_i32_90 : i32 to vector<1x512xi32>
    %178 = arith.addi %7, %177 : vector<1x512xi32>
    %c16_i32_91 = arith.constant 16 : i32
    %179 = vector.broadcast %c16_i32_91 : i32 to vector<1x512xi32>
    %180 = arith.cmpi slt, %178, %179 : vector<1x512xi32>
    %181 = arith.andi %176, %180 : vector<1x512xi1>
    %c1_i32_92 = arith.constant 1 : i32
    %182 = vector.broadcast %c1_i32_92 : i32 to vector<1x512xi32>
    %183 = arith.addi %8, %182 : vector<1x512xi32>
    %c0_i32_93 = arith.constant 0 : i32
    %184 = vector.broadcast %c0_i32_93 : i32 to vector<1x512xi32>
    %185 = arith.cmpi sge, %183, %184 : vector<1x512xi32>
    %186 = arith.andi %181, %185 : vector<1x512xi1>
    %c1_i32_94 = arith.constant 1 : i32
    %187 = vector.broadcast %c1_i32_94 : i32 to vector<1x512xi32>
    %188 = arith.addi %8, %187 : vector<1x512xi32>
    %c16_i32_95 = arith.constant 16 : i32
    %189 = vector.broadcast %c16_i32_95 : i32 to vector<1x512xi32>
    %190 = arith.cmpi slt, %188, %189 : vector<1x512xi32>
    %191 = arith.andi %186, %190 : vector<1x512xi1>
    %cst_96 = arith.constant 0.000000e+00 : f32
    %192 = vector.broadcast %cst_96 : f32 to vector<1x512xf32>
    %193 = arith.select %191, %172, %192 : vector<1x512xi1>, vector<1x512xf32>
    %c8 = arith.constant 8 : index
    %c0_97 = arith.constant 0 : index
    %194 = vector.load %arg10[%c8, %c0_97] : memref<9x512xf32, #tpu.memory_space<vmem>>, vector<1x512xf32>
    tpu.vector_store %arg10[%c8, %c0_97], %193 {strides = array<i32>} : memref<9x512xf32, #tpu.memory_space<vmem>>, vector<1x512xf32>,
    %c0_98 = arith.constant 0 : index
    %c0_99 = arith.constant 0 : index
    %195 = vector.load %arg3[%c0_98, %c0_99] : memref<8x9xbf16, #tpu.memory_space<vmem>>, vector<8x9xbf16>
    %c0_100 = arith.constant 0 : index
    %c0_101 = arith.constant 0 : index
    %196 = vector.load %arg10[%c0_100, %c0_101] : memref<9x512xf32, #tpu.memory_space<vmem>>, vector<9x512xf32>
    %197 = arith.truncf %196 : vector<9x512xf32> to vector<9x512xbf16>
    %cst_102 = arith.constant dense<0.000000e+00> : vector<8x512xf32>
    %198 = tpu.matmul %195, %197, %cst_102 {dimension_numbers = #tpu.dot_dimension_numbers<[1], [0], [0], [1], [0, 0, 1, 1], [], []>} : vector<8x9xbf16>, vector<9x512xbf16>, vector<8x512xf32> -> vector<8x512xf32>
    %c0_103 = arith.constant 0 : index
    %c0_104 = arith.constant 0 : index
    %199 = vector.load %arg4[%c0_103, %c0_104] : memref<8x1xf32, #tpu.memory_space<vmem>>, vector<8x1xf32>
    %200 = vector.broadcast %199 : vector<8x1xf32> to vector<8x512xf32>
    %201 = arith.addf %198, %200 : vector<8x512xf32>
    %cst_105 = arith.constant 0.000000e+00 : f32
    %202 = vector.broadcast %cst_105 : f32 to vector<8x512xf32>
    %203 = arith.maximumf %201, %202 : vector<8x512xf32>
    %204 = arith.truncf %203 : vector<8x512xf32> to vector<8x512xbf16>
    %c0_106 = arith.constant 0 : index
    %c0_107 = arith.constant 0 : index
    %205 = vector.load %arg5[%c0_106, %c0_107] : memref<512x2xbf16, #tpu.memory_space<vmem>>, vector<512x2xbf16>
    %cst_108 = arith.constant dense<0.000000e+00> : vector<8x2xf32>
    %206 = tpu.matmul %204, %205, %cst_108 {dimension_numbers = #tpu.dot_dimension_numbers<[1], [0], [0], [1], [0, 0, 1, 1], [], []>} : vector<8x512xbf16>, vector<512x2xbf16>, vector<8x2xf32> -> vector<8x2xf32>
    %c0_109 = arith.constant 0 : index
    %c0_110 = arith.constant 0 : index
    %207 = vector.load %arg6[%c0_109, %c0_110] : memref<10x8xbf16, #tpu.memory_space<vmem>>, vector<10x8xbf16>
    %208 = arith.truncf %206 : vector<8x2xf32> to vector<8x2xbf16>
    %cst_111 = arith.constant dense<0.000000e+00> : vector<10x2xf32>
    %209 = tpu.matmul %207, %208, %cst_111 {dimension_numbers = #tpu.dot_dimension_numbers<[1], [0], [0], [1], [0, 0, 1, 1], [], []>} : vector<10x8xbf16>, vector<8x2xbf16>, vector<10x2xf32> -> vector<10x2xf32>
    %c0_112 = arith.constant 0 : index
    %c0_113 = arith.constant 0 : index
    %210 = vector.load %arg7[%c0_112, %c0_113] : memref<10x1xf32, #tpu.memory_space<vmem>>, vector<10x1xf32>
    %211 = vector.broadcast %210 : vector<10x1xf32> to vector<10x2xf32>
    %212 = arith.addf %209, %211 : vector<10x2xf32>
    %c0_114 = arith.constant 0 : index
    %c0_115 = arith.constant 0 : index
    %213 = vector.load %arg8[%c0_114, %c0_115] : memref<10x2xf32, #tpu.memory_space<vmem>>, vector<10x2xf32>
    tpu.vector_store %arg8[%c0_114, %c0_115], %212 {strides = array<i32>} : memref<10x2xf32, #tpu.memory_space<vmem>>, vector<10x2xf32>,
    return
  }
  func.func @transform_0(%arg0: i32) -> (i32, i32) {
    %c0_i32 = arith.constant 0 : i32
    %c0_i32_0 = arith.constant 0 : i32
    return %c0_i32, %arg0 : i32, i32
  }
  func.func @transform_1(%arg0: i32) -> (i32, i32) {
    %c0_i32 = arith.constant 0 : i32
    %c0_i32_0 = arith.constant 0 : i32
    %c0_i32_1 = arith.constant 0 : i32
    return %c0_i32, %c0_i32_0 : i32, i32
  }
  func.func @transform_2(%arg0: i32) -> (i32, i32) {
    %c0_i32 = arith.constant 0 : i32
    %c0_i32_0 = arith.constant 0 : i32
    %c0_i32_1 = arith.constant 0 : i32
    return %c0_i32, %c0_i32_0 : i32, i32
  }
  func.func @transform_3(%arg0: i32) -> (i32, i32) {
    %c0_i32 = arith.constant 0 : i32
    %c0_i32_0 = arith.constant 0 : i32
    %c0_i32_1 = arith.constant 0 : i32
    return %c0_i32, %c0_i32_0 : i32, i32
  }
  func.func @transform_4(%arg0: i32) -> (i32, i32) {
    %c0_i32 = arith.constant 0 : i32
    %c0_i32_0 = arith.constant 0 : i32
    %c0_i32_1 = arith.constant 0 : i32
    return %c0_i32, %c0_i32_0 : i32, i32
  }
  func.func @transform_5(%arg0: i32) -> (i32, i32) {
    %c0_i32 = arith.constant 0 : i32
    %c0_i32_0 = arith.constant 0 : i32
    %c0_i32_1 = arith.constant 0 : i32
    return %c0_i32, %c0_i32_0 : i32, i32
  }
  func.func @transform_6(%arg0: i32) -> (i32, i32) {
    %c0_i32 = arith.constant 0 : i32
    %c0_i32_0 = arith.constant 0 : i32
    %c0_i32_1 = arith.constant 0 : i32
    return %c0_i32, %c0_i32_0 : i32, i32
  }
  func.func @transform_7(%arg0: i32) -> (i32, i32) {
    %c0_i32 = arith.constant 0 : i32
    %c0_i32_0 = arith.constant 0 : i32
    return %c0_i32, %arg0 : i32, i32
  }
}

</mosaic_0001>

<llo_original>
// kernel: tpu_custom_call.1
$region0: #{tpu_custom_call.1}
  #allocation0 [shape = 'u32[]', space=smem, size = 0x4, offset = 0x4, fixed_abs, tag = 'smem constant byte address 0x4 - core index']
  #allocation1 [shape = 'u32[144,128]{1,0:T(1,128)}', space=vmem, size = 0x12000, scoped, tag = 'internal scratch']
  #allocation2 [shape = 'f32[1,768]{1,0:T(1,128)}', space=vmem, size = 0xc00, scoped, tag = 'scratch operand']
  #allocation3 [shape = 'f32[9,512]{1,0:T(8,128)}', space=vmem, size = 0x8000, scoped, tag = 'scratch operand']
  %s0 = inlined_call_operand.vmem [shape: bf16[1,512], index: 0, kind: input, shape index: {}]
  %s1 = inlined_call_operand.vmem [shape: s32[2,512], index: 1, kind: input, shape index: {}]
  %s2 = inlined_call_operand.vmem [shape: bf16[8,9], index: 2, kind: input, shape index: {}]
  %s3 = inlined_call_operand.vmem [shape: f32[8,1], index: 3, kind: input, shape index: {}]
  %s4 = inlined_call_operand.vmem [shape: bf16[512,2], index: 4, kind: input, shape index: {}]
  %s5 = inlined_call_operand.vmem [shape: bf16[10,8], index: 5, kind: input, shape index: {}]
  %s6 = inlined_call_operand.vmem [shape: f32[10,1], index: 6, kind: input, shape index: {}]
  %s7 = inlined_call_operand.vmem [shape: f32[10,2], index: 7, kind: output, shape index: {}]
  %s8 = sld [smem:[#allocation0]]
  $region38: #{tpu_custom_call.1} parent=0
    _
  %s10 = ssub.s32 1, %s8
  %s11 = scalar_select 0, %s10, %s8
  // Predicated region
  $region2: #{tpu_custom_call.1} parent=0 // pred_check
    _
  $region3: #{tpu_custom_call.1} parent=0 // pred_check_branch
    %13 = sbr.rel (0) target = $region5
  $region4: #{tpu_custom_call.1} parent=0 // pred_region
    _
  $region5: #{tpu_custom_call.1} parent=0 // pred_fallthru
    _
  // Predicated region
  $region6: #{tpu_custom_call.1} parent=0 // pred_check
    _
  $region7: #{tpu_custom_call.1} parent=0 // pred_check_branch
    %15 = sbr.rel (0) target = $region9
  $region8: #{tpu_custom_call.1} parent=0 // pred_region
    _
  $region9: #{tpu_custom_call.1} parent=0 // pred_fallthru
    _
  // Predicated region
  $region10: #{tpu_custom_call.1} parent=0 // pred_check
    _
  $region11: #{tpu_custom_call.1} parent=0 // pred_check_branch
    %17 = sbr.rel (0) target = $region13
  $region12: #{tpu_custom_call.1} parent=0 // pred_region
    _
  $region13: #{tpu_custom_call.1} parent=0 // pred_fallthru
    _
  // Predicated region
  $region14: #{tpu_custom_call.1} parent=0 // pred_check
    _
  $region15: #{tpu_custom_call.1} parent=0 // pred_check_branch
    %19 = sbr.rel (0) target = $region17
  $region16: #{tpu_custom_call.1} parent=0 // pred_region
    _
  $region17: #{tpu_custom_call.1} parent=0 // pred_fallthru
    _
  // Predicated region
  $region18: #{tpu_custom_call.1} parent=0 // pred_check
    _
  $region19: #{tpu_custom_call.1} parent=0 // pred_check_branch
    %21 = sbr.rel (0) target = $region21
  $region20: #{tpu_custom_call.1} parent=0 // pred_region
    _
  $region21: #{tpu_custom_call.1} parent=0 // pred_fallthru
    _
  // Predicated region
  $region22: #{tpu_custom_call.1} parent=0 // pred_check
    _
  $region23: #{tpu_custom_call.1} parent=0 // pred_check_branch
    %23 = sbr.rel (0) target = $region25
  $region24: #{tpu_custom_call.1} parent=0 // pred_region
    _
  $region25: #{tpu_custom_call.1} parent=0 // pred_fallthru
    _
  // Predicated region
  $region26: #{tpu_custom_call.1} parent=0 // pred_check
    _
  $region27: #{tpu_custom_call.1} parent=0 // pred_check_branch
    %25 = sbr.rel (0) target = $region29
  $region28: #{tpu_custom_call.1} parent=0 // pred_region
    _
  $region29: #{tpu_custom_call.1} parent=0 // pred_fallthru
    _
  %v27 = vlaneseq
  %vm28 = vcmp.ge.s32.totalorder %v27, 0
  %vm29 = vcmp.lt.s32.totalorder %v27, 128
  %vm30 = vmand %vm28, %vm29
  %31 = vst.msk [vmem:[#allocation2] sm:$0x1] %vm30, 0.0
  %32 = vst.msk [vmem:[#allocation2 + $0x5] sm:$0x1] %vm30, 0.0
  %v33 = vld [vmem:[%s0] sm:$0xf]
  %v34 = vunpack.c.l.bf16 %v33
  %v37 = vunpack.c.l.s4 1966171168
  %v38 = vunpack.c.0.s8 %v37
  %v39 = vlaneseq
  %v40 = vshrl.u32 %v39, 7
  %v41 = vsub.s32 %v38, %v40
  %v42 = vrot.slane %v34, %v41
  %vm44 = vcmp.lt.s32.totalorder %v27, 512
  %vm45 = vmand %vm28, %vm44
  %46 = vst.msk [vmem:[#allocation2 + $0x1] sm:$0xf] %vm45, %v42
  %v47 = vld [vmem:[%s1] ss:$2 sm:$0xf]
  %s48 = scalar_lea.vmem %s1, 1
  %v49 = vld [vmem:[%s48] ss:$2 sm:$0xf]
  %v50 = vld [vmem:[#allocation2] sm:$0x1f]
  %v51 = vadd.s32 %v47, 4294967295
  %vm52 = vcmp.ge.s32.totalorder %v51, 0
  %vm53 = vcmp.lt.s32.totalorder %v51, 16
  %vm54 = vmand %vm52, %vm53
  %v55 = vadd.s32 %v49, 4294967295
  %vm56 = vcmp.ge.s32.totalorder %v55, 0
  %vm57 = vmand %vm54, %vm56
  %vm58 = vcmp.lt.s32.totalorder %v55, 16
  %vm59 = vmand %vm57, %vm58
  %61 = vrot.lane.b32.xlu0 %v50, 17
  %v62 = vpop.permute.xlu0 %61
  %v63 = vrot.slane %v62, 1
  %vm64 = vcmask 138240
  %v65 = vsel %vm64, %v62, %v63
  %v67 = vsel %vm59, %v65, 0.0
  %68 = vst.msk [vmem:[#allocation3] ss:$8 sm:$0xf] %vm45, %v67
  %69 = vst.msk [vmem:[#allocation3] ss:$8 sm:$0x0] %vm45, %v67
  %v70 = vld [vmem:[#allocation2] sm:$0x1f]
  %vm71 = vcmp.ge.s32.totalorder %v49, 0
  %vm72 = vmand %vm54, %vm71
  %vm73 = vcmp.lt.s32.totalorder %v49, 16
  %vm74 = vmand %vm72, %vm73
  %76 = vrot.lane.b32.xlu0 %v70, 16
  %v77 = vpop.permute.xlu0 %76
  %v78 = vrot.slane %v77, 1
  %vm79 = vcmask 130048
  %v80 = vsel %vm79, %v77, %v78
  %v82 = vsel %vm74, %v80, 0.0
  %s83 = scalar_lea.vmem [#allocation3], 1
  %84 = vst.msk [vmem:[%s83] ss:$8 sm:$0xf] %vm45, %v82
  %85 = vst.msk [vmem:[%s83] ss:$8 sm:$0x0] %vm45, %v82
  %v86 = vld [vmem:[#allocation2] sm:$0x1f]
  %v87 = vadd.s32 %v49, 1
  %vm88 = vcmp.ge.s32.totalorder %v87, 0
  %vm89 = vmand %vm54, %vm88
  %vm90 = vcmp.lt.s32.totalorder %v87, 16
  %vm91 = vmand %vm89, %vm90
  %93 = vrot.lane.b32.xlu0 %v86, 15
  %v94 = vpop.permute.xlu0 %93
  %v95 = vrot.slane %v94, 1
  %vm96 = vcmask 121856
  %v97 = vsel %vm96, %v94, %v95
  %v99 = vsel %vm91, %v97, 0.0
  %s100 = scalar_lea.vmem [#allocation3], 2
  %101 = vst.msk [vmem:[%s100] ss:$8 sm:$0xf] %vm45, %v99
  %102 = vst.msk [vmem:[%s100] ss:$8 sm:$0x0] %vm45, %v99
  %v103 = vld [vmem:[#allocation2] sm:$0x1f]
  %vm104 = vcmp.ge.s32.totalorder %v47, 0
  %vm105 = vcmp.lt.s32.totalorder %v47, 16
  %vm106 = vmand %vm104, %vm105
  %vm107 = vmand %vm106, %vm56
  %vm108 = vmand %vm107, %vm58
  %110 = vrot.lane.b32.xlu0 %v103, 1
  %v111 = vpop.permute.xlu0 %110
  %v112 = vrot.slane %v111, 1
  %vm113 = vcmask 7168
  %v114 = vsel %vm113, %v111, %v112
  %v116 = vsel %vm108, %v114, 0.0
  %s117 = scalar_lea.vmem [#allocation3], 3
  %118 = vst.msk [vmem:[%s117] ss:$8 sm:$0xf] %vm45, %v116
  %119 = vst.msk [vmem:[%s117] ss:$8 sm:$0x0] %vm45, %v116
  %v120 = vld [vmem:[#allocation2 + $0x1] sm:$0xf]
  %s121 = scalar_lea.vmem [#allocation3], 4
  %122 = vst.msk [vmem:[%s121] ss:$8 sm:$0xf] %vm45, %v120
  %123 = vst.msk [vmem:[%s121] ss:$8 sm:$0x0] %vm45, %v120
  %v124 = vld [vmem:[#allocation2 + $0x1] sm:$0x1f]
  %vm125 = vmand %vm106, %vm88
  %vm126 = vmand %vm125, %vm90
  %128 = vrot.lane.b32.xlu0 %v124, 127
  %v129 = vpop.permute.xlu0 %128
  %v130 = vrot.slane %v129, 1
  %vm131 = vcmask 1039360
  %v132 = vsel %vm131, %v129, %v130
  %v134 = vsel %vm126, %v132, 0.0
  %s135 = scalar_lea.vmem [#allocation3], 5
  %136 = vst.msk [vmem:[%s135] ss:$8 sm:$0xf] %vm45, %v134
  %137 = vst.msk [vmem:[%s135] ss:$8 sm:$0x0] %vm45, %v134
  %v138 = vld [vmem:[#allocation2 + $0x1] sm:$0x1f]
  %v139 = vadd.s32 %v47, 1
  %vm140 = vcmp.ge.s32.totalorder %v139, 0
  %vm141 = vcmp.lt.s32.totalorder %v139, 16
  %vm142 = vmand %vm140, %vm141
  %vm143 = vmand %vm142, %vm56
  %vm144 = vmand %vm143, %vm58
  %146 = vrot.lane.b32.xlu0 %v138, 113
  %v147 = vpop.permute.xlu0 %146
  %v148 = vrot.slane %v147, 1
  %vm149 = vcmask 924672
  %v150 = vsel %vm149, %v147, %v148
  %v152 = vsel %vm144, %v150, 0.0
  %s153 = scalar_lea.vmem [#allocation3], 6
  %154 = vst.msk [vmem:[%s153] ss:$8 sm:$0xf] %vm45, %v152
  %155 = vst.msk [vmem:[%s153] ss:$8 sm:$0x0] %vm45, %v152
  %v156 = vld [vmem:[#allocation2 + $0x1] sm:$0x1f]
  %vm157 = vmand %vm142, %vm71
  %vm158 = vmand %vm157, %vm73
  %160 = vrot.lane.b32.xlu0 %v156, 112
  %v161 = vpop.permute.xlu0 %160
  %v162 = vrot.slane %v161, 1
  %vm163 = vcmask 916480
  %v164 = vsel %vm163, %v161, %v162
  %v166 = vsel %vm158, %v164, 0.0
  %s167 = scalar_lea.vmem [#allocation3], 7
  %168 = vst.msk [vmem:[%s167] ss:$8 sm:$0xf] %vm45, %v166
  %169 = vst.msk [vmem:[%s167] ss:$8 sm:$0x0] %vm45, %v166
  %v170 = vld [vmem:[#allocation2 + $0x1] sm:$0x1f]
  %vm171 = vmand %vm142, %vm88
  %vm172 = vmand %vm171, %vm90
  %174 = vrot.lane.b32.xlu0 %v170, 111
  %v175 = vpop.permute.xlu0 %174
  %v176 = vrot.slane %v175, 1
  %vm177 = vcmask 908288
  %v178 = vsel %vm177, %v175, %v176
  %v180 = vsel %vm172, %v178, 0.0
  %s181 = scalar_lea.vmem [#allocation3], 32
  %182 = vst.msk [vmem:[%s181] ss:$8 sm:$0xf] %vm45, %v180
  %183 = vst.msk [vmem:[%s181] ss:$8 sm:$0x0] %vm45, %v180
  %v184 = vld [vmem:[%s2] sm:$0xf]
  %v185 = vld [vmem:[#allocation3] sm:$0xff]
  %v186 = vld [vmem:[#allocation3 + $0x8] sm:$0xff]
  %v187 = vld [vmem:[#allocation3 + $0x10] sm:$0xff]
  %v188 = vld [vmem:[#allocation3 + $0x18] sm:$0xff]
  %v189 = vld [vmem:[#allocation3 + $0x20] sm:$0x1]
  %v190 = vld [vmem:[#allocation3 + $0x28] sm:$0x1]
  %v191 = vld [vmem:[#allocation3 + $0x30] sm:$0x1]
  %v192 = vld [vmem:[#allocation3 + $0x38] sm:$0x1]
  %v193 = vpack.c.bf16 %v189, %v185
  %v194 = vpack.c.bf16 %v190, %v186
  %v195 = vpack.c.bf16 %v191, %v187
  %v196 = vpack.c.bf16 %v192, %v188
  %v197 = vld [vmem:[%s3] sm:$0xff]
  %199 = vset.pattern.permute.xlu0 0
  %200 = vperm.xlu0 %199, %v197
  %v201 = vpop.permute.xlu0 %200
  %vm203 = vcmask 72704
  %v205 = vsel %vm203, %v184, 0
  %vm207 = vcmask 1043456
  %vm208 = vcmask 1044480
  %v209 = vsel %vm207, 4294967295, 65535
  %v210 = vsel %vm208, %v209, 0
  %v212 = vand.u32 %v193, %v210
  %v215 = vand.u32 %v194, %v210
  %v218 = vand.u32 %v195, %v210
  %v221 = vand.u32 %v196, %v210
  %223 = vmatprep.subr.bf16.mxu0 0
  %224 = vmatpush1.bf16.msra.mxu0 0
  %225 = vmatprep.subr.bf16.mxu0 0
  %226 = vmatpush1.bf16.msra.mxu0 0
  %227 = vmatprep.subr.bf16.mxu0 0
  %228 = vmatpush1.bf16.msra.mxu0 0
  %229 = vmatprep.subr.bf16.mxu0 0
  %230 = vmatpush1.bf16.msra.mxu0 0
  %231 = vmatprep.subr.bf16.mxu0 0
  %232 = vmatpush1.bf16.msra.mxu0 0
  %233 = vmatprep.subr.bf16.mxu0 0
  %234 = vmatpush1.bf16.msra.mxu0 0
  %235 = vmatprep.subr.bf16.mxu0 0
  %236 = vmatpush1.bf16.msra.mxu0 0
  %237 = vmatprep.subr.bf16.mxu0 %v215
  %238 = vmatpush1.bf16.msra.mxu0 %v212
  %239 = vmatprep.subr.bf16.mxu0 0
  %240 = vmatpush2.bf16.msra.mxu0 0
  %241 = vmatprep.subr.bf16.mxu0 0
  %242 = vmatpush2.bf16.msra.mxu0 0
  %243 = vmatprep.subr.bf16.mxu0 0
  %244 = vmatpush2.bf16.msra.mxu0 0
  %245 = vmatprep.subr.bf16.mxu0 0
  %246 = vmatpush2.bf16.msra.mxu0 0
  %247 = vmatprep.subr.bf16.mxu0 0
  %248 = vmatpush2.bf16.msra.mxu0 0
  %249 = vmatprep.subr.bf16.mxu0 0
  %250 = vmatpush2.bf16.msra.mxu0 0
  %251 = vmatprep.subr.bf16.mxu0 0
  %252 = vmatpush2.bf16.msra.mxu0 0
  %253 = vmatprep.subr.bf16.mxu0 0
  %254 = vmatpush2.bf16.msra.mxu0 0
  %255 = vmatprep.mubr.bf16.mxu0 0
  %256 = vmatmul.mubr.bf16.gmra.mxu0 %v205
  %v257 = vpop.f32.mrf.mxu0
  %v258 = vadd.f32 %v201, %v257
  %v259 = vpop.f32.mrf.mxu0
  %v260 = vadd.f32 %v201, %v259
  %v261 = vpop.f32.mrf.mxu0
  %v262 = vpop.f32.mrf.mxu0
  %263 = vdwg.mxu0
  %264 = vmatprep.subr.bf16.mxu0 0
  %265 = vmatpush1.bf16.msra.mxu0 0
  %266 = vmatprep.subr.bf16.mxu0 0
  %267 = vmatpush1.bf16.msra.mxu0 0
  %268 = vmatprep.subr.bf16.mxu0 0
  %269 = vmatpush1.bf16.msra.mxu0 0
  %270 = vmatprep.subr.bf16.mxu0 0
  %271 = vmatpush1.bf16.msra.mxu0 0
  %272 = vmatprep.subr.bf16.mxu0 0
  %273 = vmatpush1.bf16.msra.mxu0 0
  %274 = vmatprep.subr.bf16.mxu0 0
  %275 = vmatpush1.bf16.msra.mxu0 0
  %276 = vmatprep.subr.bf16.mxu0 0
  %277 = vmatpush1.bf16.msra.mxu0 0
  %278 = vmatprep.subr.bf16.mxu0 %v221
  %279 = vmatpush1.bf16.msra.mxu0 %v218
  %280 = vmatprep.subr.bf16.mxu0 0
  %281 = vmatpush2.bf16.msra.mxu0 0
  %282 = vmatprep.subr.bf16.mxu0 0
  %283 = vmatpush2.bf16.msra.mxu0 0
  %284 = vmatprep.subr.bf16.mxu0 0
  %285 = vmatpush2.bf16.msra.mxu0 0
  %286 = vmatprep.subr.bf16.mxu0 0
  %287 = vmatpush2.bf16.msra.mxu0 0
  %288 = vmatprep.subr.bf16.mxu0 0
  %289 = vmatpush2.bf16.msra.mxu0 0
  %290 = vmatprep.subr.bf16.mxu0 0
  %291 = vmatpush2.bf16.msra.mxu0 0
  %292 = vmatprep.subr.bf16.mxu0 0
  %293 = vmatpush2.bf16.msra.mxu0 0
  %294 = vmatprep.subr.bf16.mxu0 0
  %295 = vmatpush2.bf16.msra.mxu0 0
  %296 = vmatprep.mubr.bf16.mxu0 0
  %297 = vmatmul.mubr.bf16.gmra.mxu0 %v205
  %v298 = vpop.f32.mrf.mxu0
  %v299 = vadd.f32 %v201, %v298
  %v300 = vpop.f32.mrf.mxu0
  %v301 = vadd.f32 %v201, %v300
  %v302 = vpop.f32.mrf.mxu0
  %v303 = vpop.f32.mrf.mxu0
  %304 = vdwg.mxu0
  %v305 = vmax.f32 %v258, 0.0
  %v306 = vmax.f32 %v260, 0.0
  %v307 = vmax.f32 %v299, 0.0
  %v308 = vmax.f32 %v301, 0.0
  %v309 = vpack.c.bf16 %v305, %v305
  %v310 = vpack.c.bf16 %v306, %v306
  %v311 = vpack.c.bf16 %v307, %v307
  %v312 = vpack.c.bf16 %v308, %v308
  %v313 = vld [vmem:[%s4] sm:$0xf]
  %v314 = vld [vmem:[%s4 + $0x4] sm:$0xf]
  %v315 = vld [vmem:[%s4 + $0x8] sm:$0xf]
  %v316 = vld [vmem:[%s4 + $0xc] sm:$0xf]
  %v317 = vld [vmem:[%s4 + $0x10] sm:$0xf]
  %v318 = vld [vmem:[%s4 + $0x14] sm:$0xf]
  %v319 = vld [vmem:[%s4 + $0x18] sm:$0xf]
  %v320 = vld [vmem:[%s4 + $0x1c] sm:$0xf]
  %v321 = vld [vmem:[%s4 + $0x20] sm:$0xf]
  %v322 = vld [vmem:[%s4 + $0x24] sm:$0xf]
  %v323 = vld [vmem:[%s4 + $0x28] sm:$0xf]
  %v324 = vld [vmem:[%s4 + $0x2c] sm:$0xf]
  %v325 = vld [vmem:[%s4 + $0x30] sm:$0xf]
  %v326 = vld [vmem:[%s4 + $0x34] sm:$0xf]
  %v327 = vld [vmem:[%s4 + $0x38] sm:$0xf]
  %v328 = vld [vmem:[%s4 + $0x3c] sm:$0xf]
  %v329 = vld [vmem:[%s4 + $0x40] sm:$0xf]
  %v330 = vld [vmem:[%s4 + $0x44] sm:$0xf]
  %v331 = vld [vmem:[%s4 + $0x48] sm:$0xf]
  %v332 = vld [vmem:[%s4 + $0x4c] sm:$0xf]
  %v333 = vld [vmem:[%s4 + $0x50] sm:$0xf]
  %v334 = vld [vmem:[%s4 + $0x54] sm:$0xf]
  %v335 = vld [vmem:[%s4 + $0x58] sm:$0xf]
  %v336 = vld [vmem:[%s4 + $0x5c] sm:$0xf]
  %v337 = vld [vmem:[%s4 + $0x60] sm:$0xf]
  %v338 = vld [vmem:[%s4 + $0x64] sm:$0xf]
  %v339 = vld [vmem:[%s4 + $0x68] sm:$0xf]
  %v340 = vld [vmem:[%s4 + $0x6c] sm:$0xf]
  %v341 = vld [vmem:[%s4 + $0x70] sm:$0xf]
  %v342 = vld [vmem:[%s4 + $0x74] sm:$0xf]
  %v343 = vld [vmem:[%s4 + $0x78] sm:$0xf]
  %v344 = vld [vmem:[%s4 + $0x7c] sm:$0xf]
  %v345 = vld [vmem:[%s4 + $0x80] sm:$0xf]
  %v346 = vld [vmem:[%s4 + $0x84] sm:$0xf]
  %v347 = vld [vmem:[%s4 + $0x88] sm:$0xf]
  %v348 = vld [vmem:[%s4 + $0x8c] sm:$0xf]
  %v349 = vld [vmem:[%s4 + $0x90] sm:$0xf]
  %v350 = vld [vmem:[%s4 + $0x94] sm:$0xf]
  %v351 = vld [vmem:[%s4 + $0x98] sm:$0xf]
  %v352 = vld [vmem:[%s4 + $0x9c] sm:$0xf]
  %v353 = vld [vmem:[%s4 + $0xa0] sm:$0xf]
  %v354 = vld [vmem:[%s4 + $0xa4] sm:$0xf]
  %v355 = vld [vmem:[%s4 + $0xa8] sm:$0xf]
  %v356 = vld [vmem:[%s4 + $0xac] sm:$0xf]
  %v357 = vld [vmem:[%s4 + $0xb0] sm:$0xf]
  %v358 = vld [vmem:[%s4 + $0xb4] sm:$0xf]
  %v359 = vld [vmem:[%s4 + $0xb8] sm:$0xf]
  %v360 = vld [vmem:[%s4 + $0xbc] sm:$0xf]
  %v361 = vld [vmem:[%s4 + $0xc0] sm:$0xf]
  %v362 = vld [vmem:[%s4 + $0xc4] sm:$0xf]
  %v363 = vld [vmem:[%s4 + $0xc8] sm:$0xf]
  %v364 = vld [vmem:[%s4 + $0xcc] sm:$0xf]
  %v365 = vld [vmem:[%s4 + $0xd0] sm:$0xf]
  %v366 = vld [vmem:[%s4 + $0xd4] sm:$0xf]
  %v367 = vld [vmem:[%s4 + $0xd8] sm:$0xf]
  %v368 = vld [vmem:[%s4 + $0xdc] sm:$0xf]
  %v369 = vld [vmem:[%s4 + $0xe0] sm:$0xf]
  %v370 = vld [vmem:[%s4 + $0xe4] sm:$0xf]
  %v371 = vld [vmem:[%s4 + $0xe8] sm:$0xf]
  %v372 = vld [vmem:[%s4 + $0xec] sm:$0xf]
  %v373 = vld [vmem:[%s4 + $0xf0] sm:$0xf]
  %v374 = vld [vmem:[%s4 + $0xf4] sm:$0xf]
  %v375 = vld [vmem:[%s4 + $0xf8] sm:$0xf]
  %v376 = vld [vmem:[%s4 + $0xfc] sm:$0xf]
  %v441 = vunpack.c.l.b16 %v313
  %v442 = vunpack.c.l.b16 %v314
  %v443 = vunpack.c.l.b16 %v315
  %v444 = vunpack.c.l.b16 %v316
  %v445 = vunpack.c.l.b16 %v317
  %v446 = vunpack.c.l.b16 %v318
  %v447 = vunpack.c.l.b16 %v319
  %v448 = vunpack.c.l.b16 %v320
  %v449 = vunpack.c.l.b16 %v321
  %v450 = vunpack.c.l.b16 %v322
  %v451 = vunpack.c.l.b16 %v323
  %v452 = vunpack.c.l.b16 %v324
  %v453 = vunpack.c.l.b16 %v325
  %v454 = vunpack.c.l.b16 %v326
  %v455 = vunpack.c.l.b16 %v327
  %v456 = vunpack.c.l.b16 %v328
  %v457 = vunpack.c.l.b16 %v329
  %v458 = vunpack.c.l.b16 %v330
  %v459 = vunpack.c.l.b16 %v331
  %v460 = vunpack.c.l.b16 %v332
  %v461 = vunpack.c.l.b16 %v333
  %v462 = vunpack.c.l.b16 %v334
  %v463 = vunpack.c.l.b16 %v335
  %v464 = vunpack.c.l.b16 %v336
  %v465 = vunpack.c.l.b16 %v337
  %v466 = vunpack.c.l.b16 %v338
  %v467 = vunpack.c.l.b16 %v339
  %v468 = vunpack.c.l.b16 %v340
  %v469 = vunpack.c.l.b16 %v341
  %v470 = vunpack.c.l.b16 %v342
  %v471 = vunpack.c.l.b16 %v343
  %v472 = vunpack.c.l.b16 %v344
  %v473 = vunpack.c.l.b16 %v345
  %v474 = vunpack.c.l.b16 %v346
  %v475 = vunpack.c.l.b16 %v347
  %v476 = vunpack.c.l.b16 %v348
  %v477 = vunpack.c.l.b16 %v349
  %v478 = vunpack.c.l.b16 %v350
  %v479 = vunpack.c.l.b16 %v351
  %v480 = vunpack.c.l.b16 %v352
  %v481 = vunpack.c.l.b16 %v353
  %v482 = vunpack.c.l.b16 %v354
  %v483 = vunpack.c.l.b16 %v355
  %v484 = vunpack.c.l.b16 %v356
  %v485 = vunpack.c.l.b16 %v357
  %v486 = vunpack.c.l.b16 %v358
  %v487 = vunpack.c.l.b16 %v359
  %v488 = vunpack.c.l.b16 %v360
  %v489 = vunpack.c.l.b16 %v361
  %v490 = vunpack.c.l.b16 %v362
  %v491 = vunpack.c.l.b16 %v363
  %v492 = vunpack.c.l.b16 %v364
  %v493 = vunpack.c.l.b16 %v365
  %v494 = vunpack.c.l.b16 %v366
  %v495 = vunpack.c.l.b16 %v367
  %v496 = vunpack.c.l.b16 %v368
  %v497 = vunpack.c.l.b16 %v369
  %v498 = vunpack.c.l.b16 %v370
  %v499 = vunpack.c.l.b16 %v371
  %v500 = vunpack.c.l.b16 %v372
  %v501 = vunpack.c.l.b16 %v373
  %v502 = vunpack.c.l.b16 %v374
  %v503 = vunpack.c.l.b16 %v375
  %v504 = vunpack.c.l.b16 %v376
  %v505 = vpack.c.b16 %v442, %v441
  %v506 = vpack.c.b16 %v444, %v443
  %v507 = vpack.c.b16 %v446, %v445
  %v508 = vpack.c.b16 %v448, %v447
  %v509 = vpack.c.b16 %v450, %v449
  %v510 = vpack.c.b16 %v452, %v451
  %v511 = vpack.c.b16 %v454, %v453
  %v512 = vpack.c.b16 %v456, %v455
  %v513 = vpack.c.b16 %v458, %v457
  %v514 = vpack.c.b16 %v460, %v459
  %v515 = vpack.c.b16 %v462, %v461
  %v516 = vpack.c.b16 %v464, %v463
  %v517 = vpack.c.b16 %v466, %v465
  %v518 = vpack.c.b16 %v468, %v467
  %v519 = vpack.c.b16 %v470, %v469
  %v520 = vpack.c.b16 %v472, %v471
  %v521 = vpack.c.b16 %v474, %v473
  %v522 = vpack.c.b16 %v476, %v475
  %v523 = vpack.c.b16 %v478, %v477
  %v524 = vpack.c.b16 %v480, %v479
  %v525 = vpack.c.b16 %v482, %v481
  %v526 = vpack.c.b16 %v484, %v483
  %v527 = vpack.c.b16 %v486, %v485
  %v528 = vpack.c.b16 %v488, %v487
  %v529 = vpack.c.b16 %v490, %v489
  %v530 = vpack.c.b16 %v492, %v491
  %v531 = vpack.c.b16 %v494, %v493
  %v532 = vpack.c.b16 %v496, %v495
  %v533 = vpack.c.b16 %v498, %v497
  %v534 = vpack.c.b16 %v500, %v499
  %v535 = vpack.c.b16 %v502, %v501
  %v536 = vpack.c.b16 %v504, %v503
  %569 = vmatprep.subr.bf16.mxu0 0
  %570 = vmatpush1.bf16.msra.mxu0 %v512
  %571 = vmatprep.subr.bf16.mxu0 0
  %572 = vmatpush1.bf16.msra.mxu0 %v511
  %573 = vmatprep.subr.bf16.mxu0 0
  %574 = vmatpush1.bf16.msra.mxu0 %v510
  %575 = vmatprep.subr.bf16.mxu0 0
  %576 = vmatpush1.bf16.msra.mxu0 %v509
  %577 = vmatprep.subr.bf16.mxu0 0
  %578 = vmatpush1.bf16.msra.mxu0 %v508
  %579 = vmatprep.subr.bf16.mxu0 0
  %580 = vmatpush1.bf16.msra.mxu0 %v507
  %581 = vmatprep.subr.bf16.mxu0 0
  %582 = vmatpush1.bf16.msra.mxu0 %v506
  %583 = vmatprep.subr.bf16.mxu0 0
  %584 = vmatpush1.bf16.msra.mxu0 %v505
  %585 = vmatprep.subr.bf16.mxu0 0
  %586 = vmatpush2.bf16.msra.mxu0 %v520
  %587 = vmatprep.subr.bf16.mxu0 0
  %588 = vmatpush2.bf16.msra.mxu0 %v519
  %589 = vmatprep.subr.bf16.mxu0 0
  %590 = vmatpush2.bf16.msra.mxu0 %v518
  %591 = vmatprep.subr.bf16.mxu0 0
  %592 = vmatpush2.bf16.msra.mxu0 %v517
  %593 = vmatprep.subr.bf16.mxu0 0
  %594 = vmatpush2.bf16.msra.mxu0 %v516
  %595 = vmatprep.subr.bf16.mxu0 0
  %596 = vmatpush2.bf16.msra.mxu0 %v515
  %597 = vmatprep.subr.bf16.mxu0 0
  %598 = vmatpush2.bf16.msra.mxu0 %v514
  %599 = vmatprep.subr.bf16.mxu0 0
  %600 = vmatpush2.bf16.msra.mxu0 %v513
  %601 = vmatprep.mubr.bf16.mxu0 %v310
  %602 = vmatmul.mubr.bf16.gmra.mxu0 %v309
  %v603 = vpop.f32.mrf.mxu0
  %v604 = vadd.f32 0.0, %v603
  %v605 = vpop.f32.mrf.mxu0
  %v606 = vpop.f32.mrf.mxu0
  %v607 = vpop.f32.mrf.mxu0
  %608 = vdwg.mxu0
  %609 = vmatprep.subr.bf16.mxu0 0
  %610 = vmatpush1.bf16.msra.mxu0 %v528
  %611 = vmatprep.subr.bf16.mxu0 0
  %612 = vmatpush1.bf16.msra.mxu0 %v527
  %613 = vmatprep.subr.bf16.mxu0 0
  %614 = vmatpush1.bf16.msra.mxu0 %v526
  %615 = vmatprep.subr.bf16.mxu0 0
  %616 = vmatpush1.bf16.msra.mxu0 %v525
  %617 = vmatprep.subr.bf16.mxu0 0
  %618 = vmatpush1.bf16.msra.mxu0 %v524
  %619 = vmatprep.subr.bf16.mxu0 0
  %620 = vmatpush1.bf16.msra.mxu0 %v523
  %621 = vmatprep.subr.bf16.mxu0 0
  %622 = vmatpush1.bf16.msra.mxu0 %v522
  %623 = vmatprep.subr.bf16.mxu0 0
  %624 = vmatpush1.bf16.msra.mxu0 %v521
  %625 = vmatprep.subr.bf16.mxu0 0
  %626 = vmatpush2.bf16.msra.mxu0 %v536
  %627 = vmatprep.subr.bf16.mxu0 0
  %628 = vmatpush2.bf16.msra.mxu0 %v535
  %629 = vmatprep.subr.bf16.mxu0 0
  %630 = vmatpush2.bf16.msra.mxu0 %v534
  %631 = vmatprep.subr.bf16.mxu0 0
  %632 = vmatpush2.bf16.msra.mxu0 %v533
  %633 = vmatprep.subr.bf16.mxu0 0
  %634 = vmatpush2.bf16.msra.mxu0 %v532
  %635 = vmatprep.subr.bf16.mxu0 0
  %636 = vmatpush2.bf16.msra.mxu0 %v531
  %637 = vmatprep.subr.bf16.mxu0 0
  %638 = vmatpush2.bf16.msra.mxu0 %v530
  %639 = vmatprep.subr.bf16.mxu0 0
  %640 = vmatpush2.bf16.msra.mxu0 %v529
  %641 = vmatprep.mubr.bf16.mxu0 %v312
  %642 = vmatmul.mubr.bf16.gmra.mxu0 %v311
  %v643 = vpop.f32.mrf.mxu0
  %v644 = vadd.f32 %v604, %v643
  %v645 = vpop.f32.mrf.mxu0
  %v646 = vpop.f32.mrf.mxu0
  %v647 = vpop.f32.mrf.mxu0
  %648 = vdwg.mxu0
  %v649 = vld [vmem:[%s5] sm:$0xf]
  %v650 = vld [vmem:[%s5 + $0x4] sm:$0x1]
  %v651 = vpack.c.bf16 %v644, %v644
  %v652 = vld [vmem:[%s6] sm:$0xff]
  %v653 = vld [vmem:[%s6 + $0x8] sm:$0x3]
  %655 = vset.pattern.permute.xlu0 0
  %656 = vperm.xlu0 %655, %v652
  %v657 = vpop.permute.xlu0 %656
  %660 = vset.pattern.permute.xlu0 0
  %661 = vperm.xlu0 %660, %v653
  %v662 = vpop.permute.xlu0 %661
  %v666 = vunpack.c.l.b16 %v649
  %v667 = vunpack.c.l.b16 %v650
  %v668 = vpack.c.b16 %v667, %v666
  %vm669 = vcmask 64512
  %v671 = vsel %vm669, %v668, 0
  %v674 = vsel %vm207, %v651, 0
  %676 = vmatprep.subr.bf16.mxu0 0
  %677 = vmatpush1.bf16.msra.mxu0 0
  %678 = vmatprep.subr.bf16.mxu0 0
  %679 = vmatpush1.bf16.msra.mxu0 0
  %680 = vmatprep.subr.bf16.mxu0 0
  %681 = vmatpush1.bf16.msra.mxu0 0
  %682 = vmatprep.subr.bf16.mxu0 0
  %683 = vmatpush1.bf16.msra.mxu0 0
  %684 = vmatprep.subr.bf16.mxu0 0
  %685 = vmatpush1.bf16.msra.mxu0 0
  %686 = vmatprep.subr.bf16.mxu0 0
  %687 = vmatpush1.bf16.msra.mxu0 0
  %688 = vmatprep.subr.bf16.mxu0 0
  %689 = vmatpush1.bf16.msra.mxu0 0
  %690 = vmatprep.subr.bf16.mxu0 0
  %691 = vmatpush1.bf16.msra.mxu0 %v674
  %692 = vmatprep.subr.bf16.mxu0 0
  %693 = vmatpush2.bf16.msra.mxu0 0
  %694 = vmatprep.subr.bf16.mxu0 0
  %695 = vmatpush2.bf16.msra.mxu0 0
  %696 = vmatprep.subr.bf16.mxu0 0
  %697 = vmatpush2.bf16.msra.mxu0 0
  %698 = vmatprep.subr.bf16.mxu0 0
  %699 = vmatpush2.bf16.msra.mxu0 0
  %700 = vmatprep.subr.bf16.mxu0 0
  %701 = vmatpush2.bf16.msra.mxu0 0
  %702 = vmatprep.subr.bf16.mxu0 0
  %703 = vmatpush2.bf16.msra.mxu0 0
  %704 = vmatprep.subr.bf16.mxu0 0
  %705 = vmatpush2.bf16.msra.mxu0 0
  %706 = vmatprep.subr.bf16.mxu0 0
  %707 = vmatpush2.bf16.msra.mxu0 0
  %708 = vmatprep.mubr.bf16.mxu0 0
  %709 = vmatmul.mubr.bf16.gmra.mxu0 %v671
  %v710 = vpop.f32.mrf.mxu0
  %v711 = vadd.f32 %v657, %v710
  %v712 = vpop.f32.mrf.mxu0
  %v713 = vpop.f32.mrf.mxu0
  %v714 = vadd.f32 %v662, %v713
  %v715 = vpop.f32.mrf.mxu0
  %716 = vdwg.mxu0
  %vm717 = vcmask 15360
  %718 = vst.msk [vmem:[%s7] sm:$0xff] %vm717, %v711
  %vm719 = vcmask 9216
  %720 = vst.msk [vmem:[%s7 + $0x8] sm:$0x3] %vm719, %v714
  // Predicated region
  $region30: #{tpu_custom_call.1} parent=0 // pred_check
    _
  $region31: #{tpu_custom_call.1} parent=0 // pred_check_branch
    %722 = sbr.rel (0) target = $region33
  $region32: #{tpu_custom_call.1} parent=0 // pred_region
    _
  $region33: #{tpu_custom_call.1} parent=0 // pred_fallthru
    _
  // Predicated region
  $region34: #{tpu_custom_call.1} parent=0 // pred_check
    _
  $region35: #{tpu_custom_call.1} parent=0 // pred_check_branch
    %724 = sbr.rel (0) target = $region37
  $region36: #{tpu_custom_call.1} parent=0 // pred_region
    _
  $region37: #{tpu_custom_call.1} parent=0 // pred_fallthru
    _

</llo_original>
